<compile_context>
chip_gen: v5e
topology: v5e:2x2
jax: 0.10.0
libtpu: 0.0.40
codegen_flags: <defaults>
</compile_context>

<pallas_src>
import functools

import jax
import jax.numpy as jnp
from jax.experimental import pallas as pl
from jax.experimental.pallas import tpu as pltpu


_LANES = 1024                  # lane-dense block width (multiple of 128)
_TARGET_BLOCK_BYTES = 2 << 20  # ~2 MiB per block -> ~8 MiB live VMEM (2x dbl-buf)


# ----------------------------------------------------------------------------
# Backward Pallas kernel: elementwise scale in the native dtype (no f32 upcast)
# ----------------------------------------------------------------------------
def _scale_kernel(g_ref, o_ref, *, scale):
    g = g_ref[...]
    o_ref[...] = g * jnp.asarray(scale, dtype=g.dtype)


def _scale_pallas(g, scale):
    orig_shape = g.shape
    orig_dtype = g.dtype
    n = g.size
    if n == 0:
        return g

    # Static fast paths (scale is a nondiff Python scalar):
    if scale == 1:                     # identity backward -> no kernel
        return g
    if scale == 0:                     # gradient blocking -> no HBM read at all
        return jnp.zeros(orig_shape, orig_dtype)

    # Flatten -> lane-dense 2D layout (rows, 1024); reshape/pad is wrapper-side
    # layout plumbing and guarantees unmasked full-lane vector stores.
    flat = g.reshape(-1)
    rows = -(-n // _LANES)                       # cdiv
    pad = rows * _LANES - n
    if pad:
        flat = jnp.pad(flat, (0, pad))
    g2d = flat.reshape(rows, _LANES)

    # Row-block count: ~2 MiB per block (multiple of 8), or the full row extent
    # for small inputs (both satisfy the (8,128) block-shape constraint).
    itemsize = jnp.dtype(orig_dtype).itemsize
    rows_per_block = max(8, (_TARGET_BLOCK_BYTES // (_LANES * itemsize)) // 8 * 8)
    tm = rows_per_block if rows >= rows_per_block else rows
    grid = (-(-rows // tm),)

    out2d = pl.pallas_call(
        functools.partial(_scale_kernel, scale=scale),
        out_shape=jax.ShapeDtypeStruct((rows, _LANES), orig_dtype),
        grid=grid,
        in_specs=[pl.BlockSpec((tm, _LANES), lambda i: (i, 0))],
        out_specs=pl.BlockSpec((tm, _LANES), lambda i: (i, 0)),
        input_output_aliases={0: 0},  # write scaled grad in place (donatable)
        compiler_params=pltpu.CompilerParams(
            dimension_semantics=("parallel",),
            vmem_limit_bytes=32 << 20),
    )(g2d)

    out = out2d.reshape(-1)
    if pad:
        out = out[:n]
    return out.reshape(orig_shape)


# ----------------------------------------------------------------------------
# scale_grad with custom VJP (matches ScaleGradFunc.apply)
# ----------------------------------------------------------------------------
@functools.partial(jax.custom_vjp, nondiff_argnums=(1,))
def scale_grad(x, scale=1):
    # Forward is the identity: no kernel, no HBM traffic.
    return x


def _scale_grad_fwd(x, scale):
    return x, None


def _scale_grad_bwd(scale, _res, g):
    return (_scale_pallas(g, scale),)


scale_grad.defvjp(_scale_grad_fwd, _scale_grad_bwd)


class ScaleGrad:
    """JAX/Pallas analogue of vlkit.ops.ScaleGrad (no parameters)."""

    def __init__(self, scale):
        self.scale = scale

    def __call__(self, x):
        return scale_grad(x, self.scale)


# ----------------------------------------------------------------------------
# Demo
# ----------------------------------------------------------------------------
if __name__ == "__main__":
    key = jax.random.PRNGKey(0)

    # Small NCHW input, as implied by the module's typical usage.
    x = jax.random.normal(key, (2, 4, 16, 16), dtype=jnp.float32)
    mod = ScaleGrad(scale=-1.0)

    # Forward: identity (no kernel).
    y = jax.block_until_ready(mod(x))
    assert y.shape == x.shape and y.dtype == x.dtype
    assert jnp.allclose(y, x), "forward must be identity"

    # Backward: gradient scaled by `scale` (single-block path, padded lanes).
    def loss(x_):
        return jnp.sum(mod(x_) * 2.0)

    g = jax.block_until_ready(jax.grad(loss)(x))
    expected = jnp.full_like(x, 2.0 * mod.scale)
    assert jnp.allclose(g, expected), "backward must scale gradient"

    # scale = 0 path: gradient blocking with no kernel at all.
    mod_zero = ScaleGrad(scale=0.0)
    g0 = jax.block_until_ready(jax.grad(lambda x_: jnp.sum(mod_zero(x_)))(x))
    assert jnp.allclose(g0, jnp.zeros_like(x)), "scale=0 must block gradient"

    # Larger input to exercise the tiled multi-block streaming path (grid > 1).
    x2 = jax.random.normal(jax.random.PRNGKey(1), (4, 8, 128, 128),
                           dtype=jnp.float32)
    mod2 = ScaleGrad(scale=0.25)

    def loss2(x_):
        return jnp.sum(mod2(x_) * 3.0)

    g2 = jax.block_until_ready(jax.jit(jax.grad(loss2))(x2))
    expected2 = jnp.full_like(x2, 3.0 * mod2.scale)
    assert jnp.allclose(g2, expected2), "tiled backward must scale gradient"

    # Non-divisible size to exercise the padding / partial-block path.
    x3 = jax.random.normal(jax.random.PRNGKey(2), (3, 5, 17, 19),
                           dtype=jnp.float32)
    mod3 = ScaleGrad(scale=-2.0)
    g3 = jax.block_until_ready(jax.jit(jax.grad(lambda x_: jnp.sum(mod3(x_))))(x3))
    assert jnp.allclose(g3, jnp.full_like(x3, -2.0)), "padded backward must scale"

    print("KERNEL_OK")
</pallas_src>

<mosaic_0001>
module attributes {stable_mosaic.version = 11 : i64} {
  func.func @_scale_kernel(%arg0: i32, %arg1: memref<2x1024xf32, #tpu.memory_space<vmem>>, %arg2: memref<2x1024xf32, #tpu.memory_space<vmem>>) attributes {dimension_semantics = [#tpu.dimension_semantics<parallel>], iteration_bounds = array<i64: 1>, scalar_prefetch = 0 : i64, scratch_operands = 0 : i64, tpu.core_type = #tpu.core_type<tc>, window_params = [{transform_indices = @transform_0, window_bounds = array<i64: 2, 1024>}, {transform_indices = @transform_1, window_bounds = array<i64: 2, 1024>}]} {
    %c0 = arith.constant 0 : index
    %c0_0 = arith.constant 0 : index
    %0 = vector.load %arg1[%c0, %c0_0] : memref<2x1024xf32, #tpu.memory_space<vmem>>, vector<2x1024xf32>
    %cst = arith.constant -1.000000e+00 : f32
    %1 = vector.broadcast %cst : f32 to vector<2x1024xf32>
    %2 = arith.mulf %0, %1 : vector<2x1024xf32>
    %c0_1 = arith.constant 0 : index
    %c0_2 = arith.constant 0 : index
    %3 = vector.load %arg2[%c0_1, %c0_2] : memref<2x1024xf32, #tpu.memory_space<vmem>>, vector<2x1024xf32>
    tpu.vector_store %arg2[%c0_1, %c0_2], %2 {strides = array<i32>} : memref<2x1024xf32, #tpu.memory_space<vmem>>, vector<2x1024xf32>,
    return
  }
  func.func @transform_0(%arg0: i32) -> (i32, i32) {
    %c0_i32 = arith.constant 0 : i32
    %c0_i32_0 = arith.constant 0 : i32
    return %arg0, %c0_i32 : i32, i32
  }
  func.func @transform_1(%arg0: i32) -> (i32, i32) {
    %c0_i32 = arith.constant 0 : i32
    %c0_i32_0 = arith.constant 0 : i32
    return %arg0, %c0_i32 : i32, i32
  }
}

</mosaic_0001>

<llo_original>
// kernel: tpu_custom_call.1
$region0: #{tpu_custom_call.1}
  #allocation0 [shape = 'u32[]', space=smem, size = 0x4, offset = 0x4, fixed_abs, tag = 'smem constant byte address 0x4 - core index']
  #allocation1 [shape = 'u32[72,128]{1,0:T(1,128)}', space=vmem, size = 0x9000, scoped, tag = 'internal scratch']
  %s0 = inlined_call_operand.hbm [shape: f32[2,1024], index: 0, kind: input, shape index: {}, may-alias: {0,1}]
  %s1 = inlined_call_operand.hbm [shape: f32[2,1024], index: 1, kind: output, shape index: {}, may-alias: {0,1}]
  %s2 = sld [smem:[#allocation0]]
  $region18: #{tpu_custom_call.1} parent=0
    _
  %s4 = ssub.s32 1, %s2
  %s5 = scalar_select 0, %s4, %s2
  $region1: #{tpu_custom_call.1} parent=0
    #allocation2 [shape = 'u8[8192]{0}', space=vmem, size = 0x2000, scoped, tag = 'input window, operand 0, single buffered']
    #allocation3 [shape = 's32[1]{0}', space=sflag, size = 0x4, scoped, tag = 'scoped memory for tpu_custom_call.1']
    #allocation4 [shape = 's32[1]{0}', space=sflag, size = 0x4, scoped, tag = 'scoped memory for tpu_custom_call.1']
    #allocation5 [shape = 'u8[8192]{0}', space=vmem, size = 0x2000, scoped, tag = 'output window, operand 0, single buffered']
    %6 = vsyncpa [#allocation3], 0
    %7 = vsyncpa [#allocation4], 0
    // Predicated region
    $region2: #{tpu_custom_call.1} parent=1 // pred_check
      _
    $region3: #{tpu_custom_call.1} parent=1 // pred_check_branch
      %9 = sbr.rel (0) target = $region5
    $region4: #{tpu_custom_call.1} parent=1 // pred_region
      %11 = vsyncadd [#allocation3], 0
      %s13 = sshll.u32 %s0, 4
      %s14 = int_to_ptr.hbm [resolvable:$true] %s13
      %s15 = sshll.u32 [#allocation2], 4
      %s16 = int_to_ptr.vmem [resolvable:$true] %s15
      %18 = dma.hbm_to_vmem [thread:$0]  %s14, 256, %s16, [#allocation3]
    $region5: #{tpu_custom_call.1} parent=1 // pred_fallthru
      _
    // Predicated region
    $region6: #{tpu_custom_call.1} parent=1 // pred_check
      _
    $region7: #{tpu_custom_call.1} parent=1 // pred_check_branch
      %20 = sbr.rel (0) target = $region9
    $region8: #{tpu_custom_call.1} parent=1 // pred_region
      %22 = dma.done [#allocation3], 256
    $region9: #{tpu_custom_call.1} parent=1 // pred_fallthru
      _
    %v23 = vld [vmem:[#allocation2] sm:$0xff]
    %v24 = vld [vmem:[#allocation2 + $0x8] sm:$0xff]
    %v25 = vmul.f32 %v23, -1.0
    %v26 = vmul.f32 %v24, -1.0
    %27 = vst [vmem:[#allocation5] sm:$0xff] %v25
    %28 = vst [vmem:[#allocation5 + $0x8] sm:$0xff] %v26
    // Predicated region
    $region10: #{tpu_custom_call.1} parent=1 // pred_check
      _
    $region11: #{tpu_custom_call.1} parent=1 // pred_check_branch
      %30 = sbr.rel (0) target = $region13
    $region12: #{tpu_custom_call.1} parent=1 // pred_region
      %32 = vsyncadd [#allocation4], 0
      %s34 = sshll.u32 [#allocation5], 4
      %s35 = int_to_ptr.vmem [resolvable:$true] %s34
      %s36 = sshll.u32 %s1, 4
      %s37 = int_to_ptr.hbm [resolvable:$true] %s36
      %39 = dma.vmem_to_hbm [thread:$0]  %s35, 256, %s37, [#allocation4]
    $region13: #{tpu_custom_call.1} parent=1 // pred_fallthru
      _
    // Predicated region
    $region14: #{tpu_custom_call.1} parent=1 // pred_check
      _
    $region15: #{tpu_custom_call.1} parent=1 // pred_check_branch
      %41 = sbr.rel (0) target = $region17
    $region16: #{tpu_custom_call.1} parent=1 // pred_region
      %43 = dma.done [#allocation4], 256
    $region17: #{tpu_custom_call.1} parent=1 // pred_fallthru
      _
    %44 = vsyncpa [#allocation3], 1
    %45 = vsyncpa [#allocation4], 1

</llo_original>
